<compile_context>
chip_gen: v6e
topology: v6e:2x2x1
jax: 0.10.0
libtpu: 0.0.40
codegen_flags: <defaults>
</compile_context>

<pallas_src>
import functools

import jax
import jax.numpy as jnp
from jax import lax
from jax.experimental import pallas as pl
from jax.experimental.pallas import tpu as pltpu


_LANE = 128
_SUBLANE = 8
_BIG = 1e30  # sentinel squared-norm for padded codebook columns


def _round_up(x, m):
    return (x + m - 1) // m * m


def _vmem_limit_and_budget():
    """Generation-aware per-core VMEM limit and tiling budget (bytes)."""
    try:
        cap = int(pltpu.get_tpu_info().vmem_capacity_bytes)
    except Exception:
        cap = 64 * 1024 * 1024  # conservative fallback: v7x per-core VMEM
    # ~45 MiB on v7x (64 MiB/core), ~90 MiB on v5e/v6e (128 MiB).
    limit = min(int(cap * 0.70), 100 * 1024 * 1024)
    budget = max(limit - 6 * 1024 * 1024, 8 * 1024 * 1024)  # compiler headroom
    return limit, budget


def _choose_tile_n(n, m_pad, d, mxu_bytes, budget_bytes):
    """Largest multiple of 8 (<= 2048, <= n) whose VMEM footprint fits."""
    d_lane = _round_up(d, _LANE)                       # VMEM lane padding of x blocks
    d_sub = _round_up(d, _SUBLANE * (4 // mxu_bytes))  # wT sublane padding (8 f32 / 16 bf16)

    # Resident operands (constant index_map); counted double-buffered.
    resident = 2 * (d_sub * m_pad * mxu_bytes + _SUBLANE * m_pad * 4)

    def per_tile(t):
        return (2 * t * d_lane * 4            # x input, double-buffered (f32)
                + 2 * t * _LANE * 4           # idx output block (lane-padded), double-buffered
                + 2 * _SUBLANE * _LANE * 4    # psum output block, double-buffered
                + 3 * t * m_pad * 4           # xw/dist + iota + select temporaries
                + t * d_lane * mxu_bytes      # x cast copy for the MXU
                + 4 * t * _LANE * 4)          # row temporaries (x_sq / min_d / err / mask)

    cap = min(_round_up(n, _SUBLANE), 2048)
    tile = 0
    t = _SUBLANE
    while t <= cap:
        if resident + per_tile(t) <= budget_bytes:
            tile = t
        t += _SUBLANE
    if tile == 0:
        # TODO(synk): add a second "arbitrary" grid axis over M blocks with a
        # running min / running argmin kept in VMEM scratch (finalized with
        # pl.when on the last M step) for codebooks too large to stay resident.
        raise ValueError(
            f"codebook ({m_pad} cols x {d} dims, {mxu_bytes}B/elem) does not fit "
            f"the VMEM budget ({budget_bytes} bytes); block it over a second grid axis.")
    return tile


def _vq_kernel(x_ref, wt_ref, wsq_ref, idx_ref, psum_ref, *,
               n_valid, tile_n, mxu_dtype):
    x = x_ref[...].astype(jnp.float32)          # (TILE_N, D)
    wt = wt_ref[...]                            # (D, M_pad), resident, already mxu_dtype
    w_sq = wsq_ref[...]                         # (1, M_pad), f32, +BIG on padded cols
    tn = x.shape[0]
    m = wt.shape[1]

    # Distance matmul on the MXU.  ||x||^2 is a per-row constant and dropped
    # from the argmin: argmin_k(||w_k||^2 - 2 x.w_k) == argmin_k ||x - w_k||^2.
    # Natural (lhs 1, rhs 0) contraction -> no transpose of the resident operand.
    xw = lax.dot_general(
        x.astype(mxu_dtype), wt,
        (((1,), (0,)), ((), ())),
        preferred_element_type=jnp.float32)     # (TILE_N, M_pad)
    dist = w_sq - 2.0 * xw

    # First-index argmin via min + iota (robust Mosaic lowering).
    min_d = jnp.min(dist, axis=1, keepdims=True)
    iota_m = lax.broadcasted_iota(jnp.int32, (tn, m), 1)
    idx = jnp.min(jnp.where(dist == min_d, iota_m, m), axis=1, keepdims=True)
    idx_ref[...] = idx                          # (TILE_N, 1) int32

    # Partial sum of squared quantization error over the valid rows of this
    # tile, from quantities already on hand:
    #   ||x - w_sel||^2 = ||x||^2 + (||w_sel||^2 - 2 x.w_sel) = x_sq + min_d.
    x_sq = jnp.sum(x * x, axis=1, keepdims=True)
    row = pl.program_id(0) * tile_n + lax.broadcasted_iota(jnp.int32, (tn, 1), 0)
    valid = (row < n_valid).astype(jnp.float32)
    partial = jnp.sum((x_sq + min_d) * valid)

    # One full-vreg (8, 128) output block per tile (unmasked lane-dense store):
    # partial goes to element [0, 0], the num_tiles scalars are summed in JAX.
    blk_mask = ((lax.broadcasted_iota(jnp.int32, (_SUBLANE, _LANE), 0) == 0)
                & (lax.broadcasted_iota(jnp.int32, (_SUBLANE, _LANE), 1) == 0))
    psum_ref[...] = jnp.where(blk_mask, partial, 0.0)


@functools.partial(jax.jit, static_argnames=("beta", "mxu_dtype"))
def group_vq_forward(latents, codebooks, beta=0.25, mxu_dtype=jnp.bfloat16):
    """Forward pass of GroupVectorQuantizer.

    latents:   (B, G*D) float32, channel-last.
    codebooks: (G, K, D) float32 codebook weights.
    Returns (quantized_latents (B, G*D), vq_loss scalar).
    """
    B, C = latents.shape
    G, K, D = codebooks.shape
    assert C == G * D, "channel dim must be num_groups * embedding_dim"

    N = B * G
    M = K * G
    M_pad = _round_up(M, _LANE)
    mxu_bytes = jnp.dtype(mxu_dtype).itemsize

    # Flat latents (no D padding in HBM) and interleaved codebook
    # 'G K D -> (K G) D', exactly as the reference encode().
    # TODO(synk): if the codebook is static across many calls, hoist w / wT /
    # w_sq construction out of the per-call path.
    x = latents.reshape(N, D)
    w = jnp.transpose(codebooks, (1, 0, 2)).reshape(M, D).astype(jnp.float32)
    w_sq = jnp.sum(w * w, axis=1)
    w_sq = jnp.pad(w_sq, (0, M_pad - M), constant_values=_BIG)[None, :]   # (1, M_pad)
    wt = jnp.pad(w.T, ((0, 0), (0, M_pad - M))).astype(mxu_dtype)         # (D, M_pad)

    vmem_limit, budget = _vmem_limit_and_budget()
    tile_n = _choose_tile_n(N, M_pad, D, mxu_bytes, budget)
    N_pad = _round_up(N, tile_n)
    num_tiles = N_pad // tile_n
    if N_pad != N:
        x = jnp.pad(x, ((0, N_pad - N), (0, 0)))

    kernel = functools.partial(_vq_kernel, n_valid=N, tile_n=tile_n,
                               mxu_dtype=mxu_dtype)

    idx_pad, psum = pl.pallas_call(
        kernel,
        grid=(num_tiles,),
        in_specs=[
            pl.BlockSpec((tile_n, D), lambda i: (i, 0)),    # latents tile
            pl.BlockSpec((D, M_pad), lambda i: (0, 0)),     # codebook^T: resident
            pl.BlockSpec((1, M_pad), lambda i: (0, 0)),     # ||w||^2:    resident
        ],
        out_specs=(
            pl.BlockSpec((tile_n, 1), lambda i: (i, 0)),
            pl.BlockSpec((_SUBLANE, _LANE), lambda i: (i, 0)),
        ),
        out_shape=(
            jax.ShapeDtypeStruct((N_pad, 1), jnp.int32),
            jax.ShapeDtypeStruct((num_tiles * _SUBLANE, _LANE), jnp.float32),
        ),
        compiler_params=pltpu.CompilerParams(
            dimension_semantics=("parallel",),
            vmem_limit_bytes=vmem_limit,
        ),
    )(x, wt, w_sq)

    # Exact f32 codebook-row gather: quantized rows are exact codebook entries
    # regardless of the MXU dtype used for the distance matmul.
    inds = idx_pad[:N, 0]
    q = jnp.take(w, inds, axis=0).reshape(B, G * D).astype(latents.dtype)

    # mse(q.detach(), x) * beta + mse(q, x.detach()) -> numerically (1+beta)*mse.
    mse = jnp.sum(psum) / (B * G * D)
    vq_loss = (1.0 + beta) * mse
    # TODO(synk): pallas_call has no VJP here -- reproducing the beta/1 gradient
    # split of the commitment/embedding losses for training needs a custom_vjp.

    # Straight-through estimator: x + (q - x).detach()  (numerically q).
    quantized = latents + lax.stop_gradient(q - latents)
    return quantized, vq_loss


def _reference_forward(latents, codebooks, beta=0.25):
    """Plain-JAX reference for correctness checking."""
    B, C = latents.shape
    G, K, D = codebooks.shape
    x_flat = latents.reshape(B * G, D)
    w = jnp.transpose(codebooks, (1, 0, 2)).reshape(K * G, D)
    dist = (jnp.sum(x_flat**2, axis=1, keepdims=True)
            + jnp.sum(w**2, axis=1)[None, :]
            - 2.0 * x_flat @ w.T)
    inds = jnp.argmin(dist, axis=1)
    q = w[inds].reshape(B, G * D)
    mse = jnp.mean((q - latents) ** 2)
    return q, (1.0 + beta) * mse


if __name__ == "__main__":
    B, G, K, D = 8, 2, 16, 32   # batch, num_groups, num_embeddings, embedding_dim
    beta = 0.25

    key = jax.random.PRNGKey(0)
    k_lat, k_cb = jax.random.split(key)
    latents = jax.random.normal(k_lat, (B, G * D), dtype=jnp.float32)
    # Deterministic codebook init matching uniform_(-1/K, 1/K)
    codebooks = jax.random.uniform(
        k_cb, (G, K, D), minval=-1.0 / K, maxval=1.0 / K, dtype=jnp.float32)

    # Exact f32 distance path (comparable to the plain-JAX reference).
    quantized, vq_loss = group_vq_forward(latents, codebooks, beta=beta,
                                          mxu_dtype=jnp.float32)
    jax.block_until_ready((quantized, vq_loss))

    q_ref, loss_ref = _reference_forward(latents, codebooks, beta=beta)
    assert quantized.shape == latents.shape
    assert jnp.allclose(quantized, q_ref, atol=1e-5, rtol=1e-5)
    assert jnp.allclose(vq_loss, loss_ref, atol=1e-5, rtol=1e-5)

    # Default bf16-MXU distance path (native MXU rate on v5e/v6e/v7x). Code
    # selection may flip only on near-ties; quantized rows are still exact
    # codebook entries, so the loss is checked loosely.
    q_bf16, loss_bf16 = group_vq_forward(latents, codebooks, beta=beta)
    jax.block_until_ready((q_bf16, loss_bf16))
    assert q_bf16.shape == latents.shape
    assert bool(jnp.isfinite(loss_bf16))
    assert jnp.allclose(loss_bf16, loss_ref, rtol=5e-2, atol=1e-3)

    print("KERNEL_OK")
</pallas_src>

<mosaic_0001>
module attributes {stable_mosaic.version = 11 : i64} {
  func.func @_vq_kernel(%arg0: i32, %arg1: memref<16x32xf32, #tpu.memory_space<vmem>>, %arg2: memref<32x128xf32, #tpu.memory_space<vmem>>, %arg3: memref<1x128xf32, #tpu.memory_space<vmem>>, %arg4: memref<16x1xi32, #tpu.memory_space<vmem>>, %arg5: memref<8x128xf32, #tpu.memory_space<vmem>>) attributes {dimension_semantics = [#tpu.dimension_semantics<parallel>], iteration_bounds = array<i64: 1>, scalar_prefetch = 0 : i64, scratch_operands = 0 : i64, tpu.core_type = #tpu.core_type<tc>, window_params = [{transform_indices = @transform_0, window_bounds = array<i64: 16, 32>}, {pipeline_mode = #tpu.pipeline_mode<synchronous>, transform_indices = @transform_1, window_bounds = array<i64: 32, 128>}, {pipeline_mode = #tpu.pipeline_mode<synchronous>, transform_indices = @transform_2, window_bounds = array<i64: 1, 128>}, {transform_indices = @transform_3, window_bounds = array<i64: 16, 1>}, {transform_indices = @transform_4, window_bounds = array<i64: 8, 128>}]} {
    %c0 = arith.constant 0 : index
    %c0_0 = arith.constant 0 : index
    %0 = vector.load %arg1[%c0, %c0_0] : memref<16x32xf32, #tpu.memory_space<vmem>>, vector<16x32xf32>
    %c0_1 = arith.constant 0 : index
    %c0_2 = arith.constant 0 : index
    %1 = vector.load %arg2[%c0_1, %c0_2] : memref<32x128xf32, #tpu.memory_space<vmem>>, vector<32x128xf32>
    %c0_3 = arith.constant 0 : index
    %c0_4 = arith.constant 0 : index
    %2 = vector.load %arg3[%c0_3, %c0_4] : memref<1x128xf32, #tpu.memory_space<vmem>>, vector<1x128xf32>
    %cst = arith.constant dense<0.000000e+00> : vector<16x128xf32>
    %3 = tpu.matmul %0, %1, %cst {dimension_numbers = #tpu.dot_dimension_numbers<[1], [0], [0], [1], [0, 0, 1, 1], [], []>} : vector<16x32xf32>, vector<32x128xf32>, vector<16x128xf32> -> vector<16x128xf32>
    %cst_5 = arith.constant 2.000000e+00 : f32
    %4 = vector.broadcast %cst_5 : f32 to vector<16x128xf32>
    %5 = arith.mulf %4, %3 : vector<16x128xf32>
    %6 = vector.broadcast %2 : vector<1x128xf32> to vector<16x128xf32>
    %7 = arith.subf %6, %5 : vector<16x128xf32>
    %cst_6 = arith.constant dense<0x7F800000> : vector<16xf32>
    %8 = vector.multi_reduction <minimumf>, %7, %cst_6 [1] : vector<16x128xf32> to vector<16xf32>
    %9 = vector.shape_cast %8 : vector<16xf32> to vector<16x1xf32>
    %10 = tpu.iota {dimensions = array<i32: 1>} : vector<16x128xi32>
    %11 = vector.broadcast %9 : vector<16x1xf32> to vector<16x128xf32>
    %12 = arith.cmpf oeq, %7, %11 : vector<16x128xf32>
    %c128_i32 = arith.constant 128 : i32
    %13 = vector.broadcast %c128_i32 : i32 to vector<16x128xi32>
    %14 = arith.select %12, %10, %13 : vector<16x128xi1>, vector<16x128xi32>
    %cst_7 = arith.constant dense<2147483647> : vector<16xi32>
    %15 = vector.multi_reduction <minsi>, %14, %cst_7 [1] : vector<16x128xi32> to vector<16xi32>
    %16 = vector.shape_cast %15 : vector<16xi32> to vector<16x1xi32>
    %c0_8 = arith.constant 0 : index
    %c0_9 = arith.constant 0 : index
    %17 = vector.load %arg4[%c0_8, %c0_9] : memref<16x1xi32, #tpu.memory_space<vmem>>, vector<16x1xi32>
    tpu.vector_store %arg4[%c0_8, %c0_9], %16 {strides = array<i32>} : memref<16x1xi32, #tpu.memory_space<vmem>>, vector<16x1xi32>,
    %18 = arith.mulf %0, %0 : vector<16x32xf32>
    %cst_10 = arith.constant dense<0.000000e+00> : vector<16xf32>
    %19 = vector.multi_reduction <add>, %18, %cst_10 [1] : vector<16x32xf32> to vector<16xf32>
    %20 = vector.shape_cast %19 : vector<16xf32> to vector<16x1xf32>
    %c16_i32 = arith.constant 16 : i32
    %21 = arith.muli %arg0, %c16_i32 : i32
    %22 = tpu.iota {dimensions = array<i32: 0>} : vector<16x1xi32>
    %23 = vector.broadcast %21 : i32 to vector<16x1xi32>
    %24 = arith.addi %23, %22 : vector<16x1xi32>
    %c16_i32_11 = arith.constant 16 : i32
    %25 = vector.broadcast %c16_i32_11 : i32 to vector<16x1xi32>
    %26 = arith.cmpi slt, %24, %25 : vector<16x1xi32>
    %27 = arith.extui %26 : vector<16x1xi1> to vector<16x1xi32>
    %28 = arith.sitofp %27 : vector<16x1xi32> to vector<16x1xf32>
    %29 = arith.addf %20, %9 : vector<16x1xf32>
    %30 = arith.mulf %29, %28 : vector<16x1xf32>
    %31 = vector.shape_cast %30 : vector<16x1xf32> to vector<1x16x1xf32>
    %cst_12 = arith.constant dense<0.000000e+00> : vector<1xf32>
    %32 = vector.multi_reduction <add>, %31, %cst_12 [1, 2] : vector<1x16x1xf32> to vector<1xf32>
    %33 = vector.shape_cast %32 : vector<1xf32> to vector<1x1x1xf32>
    %34 = vector.extract %33[0, 0, 0] : f32 from vector<1x1x1xf32>
    %35 = tpu.iota {dimensions = array<i32: 0>} : vector<8x128xi32>
    %c0_i32 = arith.constant 0 : i32
    %36 = vector.broadcast %c0_i32 : i32 to vector<8x128xi32>
    %37 = arith.cmpi eq, %35, %36 : vector<8x128xi32>
    %38 = tpu.iota {dimensions = array<i32: 1>} : vector<8x128xi32>
    %c0_i32_13 = arith.constant 0 : i32
    %39 = vector.broadcast %c0_i32_13 : i32 to vector<8x128xi32>
    %40 = arith.cmpi eq, %38, %39 : vector<8x128xi32>
    %41 = arith.andi %37, %40 : vector<8x128xi1>
    %cst_14 = arith.constant 0.000000e+00 : f32
    %42 = vector.broadcast %34 : f32 to vector<8x128xf32>
    %43 = vector.broadcast %cst_14 : f32 to vector<8x128xf32>
    %44 = arith.select %41, %42, %43 : vector<8x128xi1>, vector<8x128xf32>
    %c0_15 = arith.constant 0 : index
    %c0_16 = arith.constant 0 : index
    %45 = vector.load %arg5[%c0_15, %c0_16] : memref<8x128xf32, #tpu.memory_space<vmem>>, vector<8x128xf32>
    tpu.vector_store %arg5[%c0_15, %c0_16], %44 {strides = array<i32>} : memref<8x128xf32, #tpu.memory_space<vmem>>, vector<8x128xf32>,
    return
  }
  func.func @transform_0(%arg0: i32) -> (i32, i32) {
    %c0_i32 = arith.constant 0 : i32
    %c0_i32_0 = arith.constant 0 : i32
    return %arg0, %c0_i32 : i32, i32
  }
  func.func @transform_1(%arg0: i32) -> (i32, i32) {
    %c0_i32 = arith.constant 0 : i32
    %c0_i32_0 = arith.constant 0 : i32
    %c0_i32_1 = arith.constant 0 : i32
    return %c0_i32, %c0_i32_0 : i32, i32
  }
  func.func @transform_2(%arg0: i32) -> (i32, i32) {
    %c0_i32 = arith.constant 0 : i32
    %c0_i32_0 = arith.constant 0 : i32
    %c0_i32_1 = arith.constant 0 : i32
    return %c0_i32, %c0_i32_0 : i32, i32
  }
  func.func @transform_3(%arg0: i32) -> (i32, i32) {
    %c0_i32 = arith.constant 0 : i32
    %c0_i32_0 = arith.constant 0 : i32
    return %arg0, %c0_i32 : i32, i32
  }
  func.func @transform_4(%arg0: i32) -> (i32, i32) {
    %c0_i32 = arith.constant 0 : i32
    %c0_i32_0 = arith.constant 0 : i32
    return %arg0, %c0_i32 : i32, i32
  }
}

</mosaic_0001>

<llo_original>
// kernel: group_vq_forward.1
$region0: #{group_vq_forward.1}
  #allocation0 [shape = 'u32[]', space=smem, size = 0x4, offset = 0x4, fixed_abs, tag = 'smem constant byte address 0x4 - core index']
  #allocation1 [shape = 'u32[144,128]{1,0:T(1,128)}', space=vmem, size = 0x12000, scoped, tag = 'internal scratch']
  %s0 = inlined_call_operand.vmem [shape: f32[16,32], index: 0, kind: input, shape index: {}]
  %s1 = inlined_call_operand.vmem [shape: f32[32,128], index: 1, kind: input, shape index: {}]
  %s2 = inlined_call_operand.vmem [shape: f32[1,128], index: 2, kind: input, shape index: {}]
  %s3 = inlined_call_operand.vmem [shape: s32[16,1], index: 3, kind: output, shape index: {0}]
  %s4 = inlined_call_operand.vmem [shape: f32[8,128], index: 4, kind: output, shape index: {1}]
  %5 = xla_tuple %s3, %s4
  %s6 = sld [smem:[#allocation0]]
  $region30: #{group_vq_forward.1} parent=0
    _
  %s8 = ssub.s32 1, %s6
  %s9 = scalar_select 0, %s8, %s6
  // Predicated region
  $region2: #{group_vq_forward.1} parent=0 // pred_check
    _
  $region3: #{group_vq_forward.1} parent=0 // pred_check_branch
    %11 = sbr.rel (0) target = $region5
  $region4: #{group_vq_forward.1} parent=0 // pred_region
    _
  $region5: #{group_vq_forward.1} parent=0 // pred_fallthru
    _
  // Predicated region
  $region6: #{group_vq_forward.1} parent=0 // pred_check
    _
  $region7: #{group_vq_forward.1} parent=0 // pred_check_branch
    %13 = sbr.rel (0) target = $region9
  $region8: #{group_vq_forward.1} parent=0 // pred_region
    _
  $region9: #{group_vq_forward.1} parent=0 // pred_fallthru
    _
  // Predicated region
  $region10: #{group_vq_forward.1} parent=0 // pred_check
    _
  $region11: #{group_vq_forward.1} parent=0 // pred_check_branch
    %15 = sbr.rel (0) target = $region13
  $region12: #{group_vq_forward.1} parent=0 // pred_region
    _
  $region13: #{group_vq_forward.1} parent=0 // pred_fallthru
    _
  %v16 = vld [vmem:[%s0] sm:$0xff]
  %v17 = vld [vmem:[%s0 + $0x8] sm:$0xff]
  %v18 = vld [vmem:[%s1] sm:$0xff]
  %v19 = vld [vmem:[%s1 + $0x8] sm:$0xff]
  %v20 = vld [vmem:[%s1 + $0x10] sm:$0xff]
  %v21 = vld [vmem:[%s1 + $0x18] sm:$0xff]
  %v22 = vld [vmem:[%s2] sm:$0x1]
  %vm23 = vcmask 261120
  %v25 = vsel %vm23, %v16, 0
  %v28 = vsel %vm23, %v17, 0
  %30 = vmatprep.subr.mxu0 0.0
  %31 = vmatpush1.msra.mxu0 0.0
  %32 = vmatprep.subr.mxu0 0.0
  %33 = vmatpush1.msra.mxu0 0.0
  %34 = vmatprep.subr.mxu0 0.0
  %35 = vmatpush1.msra.mxu0 0.0
  %36 = vmatprep.subr.mxu0 0.0
  %37 = vmatpush1.msra.mxu0 0.0
  %38 = vmatprep.subr.mxu0 0.0
  %39 = vmatpush1.msra.mxu0 0.0
  %40 = vmatprep.subr.mxu0 0.0
  %41 = vmatpush1.msra.mxu0 0.0
  %42 = vmatprep.subr.mxu0 0.0
  %43 = vmatpush1.msra.mxu0 0.0
  %44 = vmatprep.subr.mxu0 0.0
  %45 = vmatpush1.msra.mxu0 0.0
  %46 = vmatprep.subr.mxu0 0.0
  %47 = vmatpush1.msra.mxu0 0.0
  %48 = vmatprep.subr.mxu0 0.0
  %49 = vmatpush1.msra.mxu0 0.0
  %50 = vmatprep.subr.mxu0 0.0
  %51 = vmatpush1.msra.mxu0 0.0
  %52 = vmatprep.subr.mxu0 0.0
  %53 = vmatpush1.msra.mxu0 0.0
  %54 = vmatprep.subr.mxu0 0.0
  %55 = vmatpush1.msra.mxu0 %v21
  %56 = vmatprep.subr.mxu0 0.0
  %57 = vmatpush1.msra.mxu0 %v20
  %58 = vmatprep.subr.mxu0 0.0
  %59 = vmatpush1.msra.mxu0 %v19
  %60 = vmatprep.subr.mxu0 0.0
  %61 = vmatpush1.msra.mxu0 %v18
  %62 = vmatprep.subr.mxu0 0.0
  %63 = vmatpush2.msra.mxu0 0.0
  %64 = vmatprep.subr.mxu0 0.0
  %65 = vmatpush2.msra.mxu0 0.0
  %66 = vmatprep.subr.mxu0 0.0
  %67 = vmatpush2.msra.mxu0 0.0
  %68 = vmatprep.subr.mxu0 0.0
  %69 = vmatpush2.msra.mxu0 0.0
  %70 = vmatprep.subr.mxu0 0.0
  %71 = vmatpush2.msra.mxu0 0.0
  %72 = vmatprep.subr.mxu0 0.0
  %73 = vmatpush2.msra.mxu0 0.0
  %74 = vmatprep.subr.mxu0 0.0
  %75 = vmatpush2.msra.mxu0 0.0
  %76 = vmatprep.subr.mxu0 0.0
  %77 = vmatpush2.msra.mxu0 0.0
  %78 = vmatprep.subr.mxu0 0.0
  %79 = vmatpush2.msra.mxu0 0.0
  %80 = vmatprep.subr.mxu0 0.0
  %81 = vmatpush2.msra.mxu0 0.0
  %82 = vmatprep.subr.mxu0 0.0
  %83 = vmatpush2.msra.mxu0 0.0
  %84 = vmatprep.subr.mxu0 0.0
  %85 = vmatpush2.msra.mxu0 0.0
  %86 = vmatprep.subr.mxu0 0.0
  %87 = vmatpush2.msra.mxu0 0.0
  %88 = vmatprep.subr.mxu0 0.0
  %89 = vmatpush2.msra.mxu0 0.0
  %90 = vmatprep.subr.mxu0 0.0
  %91 = vmatpush2.msra.mxu0 0.0
  %92 = vmatprep.subr.mxu0 0.0
  %93 = vmatpush2.msra.mxu0 0.0
  %94 = vmatprep.mubr.f32.mxu0 0.0
  %95 = vmatmul.mubr.f32.gmra.mxu0 %v25
  %v96 = vpop.f32.mrf.mxu0
  %v97 = vadd.f32 0.0, %v96
  %v98 = vpop.f32.mrf.mxu0
  %99 = vmatprep.mubr.f32.mxu0 0.0
  %100 = vmatmul.mubr.f32.gmra.mxu0 %v28
  %v101 = vpop.f32.mrf.mxu0
  %v102 = vadd.f32 0.0, %v101
  %v103 = vpop.f32.mrf.mxu0
  %104 = vdwg.mxu0
  %v105 = vmul.f32 %v97, 2.0
  %v106 = vmul.f32 %v102, 2.0
  %v108 = vlaneseq
  %v109 = vshrl.u32 %v108, 7
  %v110 = vsub.s32 0, %v109
  %v111 = vrot.slane %v22, %v110
  %v113 = vsub.f32 %v111, %v105
  %v114 = vsub.f32 %v111, %v106
  %115 = vmin.xlane.f32.xlu0 %v113
  %v116 = vpop.xlane.xlu0 %115
  %117 = vmin.xlane.f32.xlu0 %v114
  %v118 = vpop.xlane.xlu0 %117
  %v119 = vlaneseq
  %v120 = vand.u32 %v119, 127
  %vm121 = vcmp.eq.f32.partialorder %v113, %v116
  %vm122 = vcmp.eq.f32.partialorder %v114, %v118
  %v123 = vsel %vm121, %v120, 128
  %v124 = vsel %vm122, %v120, 128
  %v125 = vand.u32 %v123, 65535
  %v126 = vshra.s32 %v123, 16
  %v127 = vcvt.s32.f32 %v125
  %v128 = vcvt.s32.f32 %v126
  %129 = vmin.xlane.f32.xlu0 %v128
  %v130 = vpop.xlane.xlu0 %129
  %vm131 = vcmp.eq.f32.partialorder %v128, %v130
  %v132 = vsel %vm131, %v127, inf
  %133 = vmin.xlane.f32.xlu0 %v132
  %v134 = vpop.xlane.xlu0 %133
  %v135 = vcvt.f32.s32 %v134
  %v136 = vcvt.f32.s32 %v130
  %v137 = vshll.u32 %v136, 16
  %v138 = vadd.s32 %v137, %v135
  %v139 = vand.u32 %v124, 65535
  %v140 = vshra.s32 %v124, 16
  %v141 = vcvt.s32.f32 %v139
  %v142 = vcvt.s32.f32 %v140
  %143 = vmin.xlane.f32.xlu0 %v142
  %v144 = vpop.xlane.xlu0 %143
  %vm145 = vcmp.eq.f32.partialorder %v142, %v144
  %v146 = vsel %vm145, %v141, inf
  %147 = vmin.xlane.f32.xlu0 %v146
  %v148 = vpop.xlane.xlu0 %147
  %v149 = vcvt.f32.s32 %v148
  %v150 = vcvt.f32.s32 %v144
  %v151 = vshll.u32 %v150, 16
  %v152 = vadd.s32 %v151, %v149
  %vm153 = vcmask 7168
  %154 = vst.msk [vmem:[%s3] sm:$0xff] %vm153, %v138
  %155 = vst.msk [vmem:[%s3 + $0x8] sm:$0xff] %vm153, %v152
  %v156 = vmul.f32 %v16, %v16
  %v157 = vmul.f32 %v17, %v17
  %v158 = vsel %vm23, %v156, 0.0
  %159 = vadd.xlane.f32.xlu0 %v158
  %v160 = vpop.xlane.xlu0 %159
  %v161 = vsel %vm23, %v157, 0.0
  %162 = vadd.xlane.f32.xlu0 %v161
  %v163 = vpop.xlane.xlu0 %162
  %s164 = smul.u32 0, 16
  %v165 = vlaneseq
  %v166 = vshrl.u32 %v165, 7
  %v167 = vadd.s32 %v166, 8
  %v168 = vstv %s164
  %v169 = vadd.s32 %v168, %v166
  %v170 = vadd.s32 %v168, %v167
  %vm171 = vcmp.lt.s32.totalorder %v169, 16
  %vm172 = vcmp.lt.s32.totalorder %v170, 16
  %v173 = vsel %vm171, 1, 0
  %v174 = vsel %vm172, 1, 0
  %v175 = vcvt.s32.f32 %v173
  %v176 = vcvt.s32.f32 %v174
  %v177 = vadd.f32 %v160, %v116
  %v178 = vadd.f32 %v163, %v118
  %v179 = vmul.f32 %v177, %v175
  %v180 = vmul.f32 %v178, %v176
  %v181 = vsel %vm153, %v179, 0.0
  %v182 = vsel %vm153, %v180, 0.0
  %v183 = vadd.f32 %v181, %v182
  %184 = vadd.xlane.f32.xlu0 %v183
  %v185 = vpop.xlane.xlu0 %184
  %v186 = vrot.slane %v185, 4
  %v187 = vadd.f32 %v185, %v186
  %v188 = vrot.slane %v187, 2
  %v189 = vadd.f32 %v187, %v188
  %v190 = vrot.slane %v189, 1
  %v191 = vadd.f32 %v189, %v190
  %s192 = vtos %v191
  %vm193 = vcmp.eq.s32.totalorder %v166, 0
  %vm194 = vcmp.eq.s32.totalorder %v120, 0
  %vm195 = vmand %vm193, %vm194
  %v196 = vstv %s192
  %v197 = vsel %vm195, %v196, 0.0
  %198 = vst [vmem:[%s4] sm:$0xff] %v197
  // Predicated region
  $region14: #{group_vq_forward.1} parent=0 // pred_check
    _
  $region15: #{group_vq_forward.1} parent=0 // pred_check_branch
    %200 = sbr.rel (0) target = $region17
  $region16: #{group_vq_forward.1} parent=0 // pred_region
    _
  $region17: #{group_vq_forward.1} parent=0 // pred_fallthru
    _
  // Predicated region
  $region18: #{group_vq_forward.1} parent=0 // pred_check
    _
  $region19: #{group_vq_forward.1} parent=0 // pred_check_branch
    %202 = sbr.rel (0) target = $region21
  $region20: #{group_vq_forward.1} parent=0 // pred_region
    _
  $region21: #{group_vq_forward.1} parent=0 // pred_fallthru
    _
  // Predicated region
  $region22: #{group_vq_forward.1} parent=0 // pred_check
    _
  $region23: #{group_vq_forward.1} parent=0 // pred_check_branch
    %204 = sbr.rel (0) target = $region25
  $region24: #{group_vq_forward.1} parent=0 // pred_region
    _
  $region25: #{group_vq_forward.1} parent=0 // pred_fallthru
    _
  // Predicated region
  $region26: #{group_vq_forward.1} parent=0 // pred_check
    _
  $region27: #{group_vq_forward.1} parent=0 // pred_check_branch
    %206 = sbr.rel (0) target = $region29
  $region28: #{group_vq_forward.1} parent=0 // pred_region
    _
  $region29: #{group_vq_forward.1} parent=0 // pred_fallthru
    _

</llo_original>
